<compile_context>
chip_gen: v5e
topology: v5e:2x2
jax: 0.10.0
libtpu: 0.0.40
codegen_flags: <defaults>
</compile_context>

<pallas_src>
import jax
import jax.numpy as jnp
from jax.experimental import pallas as pl
from jax.experimental.pallas import tpu as pltpu

# ---- default hyperparameters from ControlledSparsityLoss.__init__ ----
SELECTION_RATE = 1.0
TRANSITION_RATE = 0.0
LAGRANGE_ALPHA = 0.5
LAGRANGE_LR = 0.05
LAMBDA_INIT = 1.0      # initial self.lambdas['L0'] and ['lasso']
LAMBDA_MIN = 1e-12
LAMBDA_MAX = 5.0
GAMMA = 0.5
C_MA_INIT = 0.0        # initial self.c_mas[-1]


def _row_stats(pdf0, mask, inv_n):
    """Per-row masked L0 / lasso given pdf0 = P(z_t == 0), a 0/1 mask and
    inv_n = 1 / mask.sum(axis=1, keepdims=True).  Shapes (TB, T) / (TB, 1)."""
    t = pdf0.shape[1]

    # L0:  sum((1 - pdf0) * mask) / n  ==  1 - sum(pdf0 * mask) / n
    pm_sum = jnp.sum(pdf0 * mask, axis=1, keepdims=True)
    l0 = 1.0 - pm_sum * inv_n

    # lasso: p0*(1-p1) + (1-p0)*p1 == p0 + p1 - 2*p0*p1, summed over i<T-1.
    # Compute over ALL columns with a wrapped neighbour (XLU roll), then
    # subtract the wrapped last-column term as a (TB,1) correction -- cheaper
    # on the VPU than an iota/cmp/cast per-element transition mask.
    pdf0_next = pltpu.roll(pdf0, shift=t - 1, axis=1)   # [:, i] = pdf0[:, (i+1)%T]
    trans = (pdf0 + pdf0_next - 2.0 * (pdf0 * pdf0_next)) * mask
    trans_sum = jnp.sum(trans, axis=1, keepdims=True)
    p_last = pdf0[:, t - 1:t]
    p_first = pdf0[:, 0:1]
    m_last = mask[:, t - 1:t]
    wrap = (p_last + p_first - 2.0 * (p_last * p_first)) * m_last
    lasso = (trans_sum - wrap) * inv_n
    return l0, lasso


def _rows_from_mask_kernel(logp0_ref, mask_ref, l0_row_ref, lasso_row_ref):
    """General path: arbitrary 0/1 token_mask streamed alongside log_p0."""
    pdf0 = jnp.exp(logp0_ref[...])                      # (TB, T)  P(z_t == 0)
    mask = mask_ref[...].astype(jnp.float32)            # (TB, T)  0/1
    # Exact reciprocal (not approx=True) to stay within verification tolerance.
    # NOTE: rows with mask.sum()==0 produce NaN, exactly like the PyTorch ref.
    inv_n = 1.0 / jnp.sum(mask, axis=1, keepdims=True)  # (TB, 1)
    l0, lasso = _row_stats(pdf0, mask, inv_n)
    l0_row_ref[...] = l0
    lasso_row_ref[...] = lasso


def _rows_from_lengths_kernel(logp0_ref, len_ref, l0_row_ref, lasso_row_ref):
    """Fast path: prefix mask described by per-row lengths (no (B,T) mask DMA)."""
    pdf0 = jnp.exp(logp0_ref[...])                      # (TB, T)
    tb, t = pdf0.shape
    lengths_i = len_ref[...]                            # (TB, 1) int32
    col = jax.lax.broadcasted_iota(jnp.int32, (tb, t), 1)
    mask = (col < lengths_i).astype(jnp.float32)        # synthesized in-register
    inv_n = 1.0 / lengths_i.astype(jnp.float32)         # mask_sum == length
    l0, lasso = _row_stats(pdf0, mask, inv_n)
    l0_row_ref[...] = l0
    lasso_row_ref[...] = lasso


def _default_tile_b(B, T, target_bytes_per_block=6 << 20):
    """Batch-tile rows: sublane aligned, ~target bytes per f32 input block,
    and >=2 grid tiles when B > 8 so both v7x TensorCores get work."""
    if B <= 8:
        return B                 # single block; block dim == full dim is legal
    rows = min(B, max(8, target_bytes_per_block // (T * 4)))
    rows = max(8, (rows // 8) * 8)
    # Cap so the "parallel" batch axis has at least two tiles (v7x megacore).
    half = -(-B // 2)
    half8 = max(8, ((half + 7) // 8) * 8)
    return max(8, min(rows, half8))


def controlled_sparsity_loss(log_p0, token_mask=None, *, lengths=None,
                             tile_b=None, lambdas=None, c_ma_prev=None):
    """Forward pass of ControlledSparsityLoss.

    Either `token_mask` (arbitrary 0/1 mask, shape (B, T)) or `lengths`
    (per-row valid-prefix lengths, shape (B,), preferred) must be provided.
    Returns (loss, new_lambdas, new_c_mas_tail); the latter two are the module
    state updates the PyTorch forward performs in place.
    """
    log_p0 = jnp.asarray(log_p0, jnp.float32)
    B, T = log_p0.shape
    if tile_b is None:
        tile_b = _default_tile_b(B, T)
    grid = (pl.cdiv(B, tile_b),)

    logp_spec = pl.BlockSpec((tile_b, T), lambda i: (i, 0))
    out_shape = (jax.ShapeDtypeStruct((B, 1), jnp.float32),
                 jax.ShapeDtypeStruct((B, 1), jnp.float32))
    out_specs = (pl.BlockSpec((tile_b, 1), lambda i: (i, 0)),
                 pl.BlockSpec((tile_b, 1), lambda i: (i, 0)))

    if lengths is not None:
        aux = jnp.asarray(lengths, jnp.int32).reshape(B, 1)
        aux_spec = pl.BlockSpec((tile_b, 1), lambda i: (i, 0))
        kernel = _rows_from_lengths_kernel
        aux_block_bytes = tile_b * 4
    else:
        assert token_mask is not None, "provide token_mask or lengths"
        # 0/1 masks are exact in bf16/int8.  int8 (5 bytes/elem of HBM traffic
        # vs 6) is used when the batch tile matches the native int8 sublane
        # tile (32 rows); otherwise keep the known-good bf16 layout.
        # TODO(synk): a fractional/weighted mask would need an f32 stream here.
        mask_dtype = jnp.int8 if tile_b % 32 == 0 else jnp.bfloat16
        aux = jnp.asarray(token_mask, mask_dtype)
        aux_spec = pl.BlockSpec((tile_b, T), lambda i: (i, 0))
        kernel = _rows_from_mask_kernel
        aux_block_bytes = tile_b * T * jnp.dtype(mask_dtype).itemsize

    # Explicit VMEM budget: double-buffered input blocks + lane-padded output
    # columns + headroom.  Raises v5e's 16 MiB scoped default when needed while
    # staying far below v7x's 64 MiB physical per TensorCore.
    vmem_need = 2 * (tile_b * T * 4 + aux_block_bytes + 2 * tile_b * 128 * 4)
    vmem_limit = int(min(max(vmem_need + (2 << 20), 16 << 20), 48 << 20))

    # TODO(synk): if T is ever so large that a (tile_b, T) block overflows the
    # VMEM budget, add an "arbitrary" trailing grid axis over T and carry the
    # previous tile's last pdf0 column in a (tile_b, 1) VMEM scratch for the
    # lasso boundary term (the T ceiling is ~2x lower on v7x than v5e/v6e).
    l0_rows, lasso_rows = pl.pallas_call(
        kernel,
        out_shape=out_shape,
        grid=grid,
        in_specs=[logp_spec, aux_spec],
        out_specs=out_specs,
        compiler_params=pltpu.CompilerParams(
            dimension_semantics=("parallel",),
            vmem_limit_bytes=vmem_limit),
    )(log_p0, aux)

    # Tiny final reduction + scalar Lagrange math stay in plain JAX (hoisted
    # out of the per-tile hot loop).
    l0 = jnp.sum(l0_rows) / B
    lasso = jnp.sum(lasso_rows) / B

    lam_l0 = jnp.float32(LAMBDA_INIT) if lambdas is None else lambdas["L0"]
    lam_lasso = jnp.float32(LAMBDA_INIT) if lambdas is None else lambdas["lasso"]
    c_prev = jnp.float32(C_MA_INIT) if c_ma_prev is None else c_ma_prev

    # TODO(synk): the straight-through trick ct_hat + (ct_ma - ct_hat).detach()
    # only changes the backward pass; the forward value equals ct_ma, which is
    # what this forward-only implementation computes.
    def constraint(value, target, lam, prev_ma):
        ct_hat = jnp.abs(value - target)
        ct_ma = LAGRANGE_ALPHA * prev_ma + (1.0 - LAGRANGE_ALPHA) * ct_hat
        new_lam = jnp.clip(lam * jnp.exp(LAGRANGE_LR * ct_ma),
                           LAMBDA_MIN, LAMBDA_MAX)
        return new_lam * ct_ma, ct_ma, new_lam

    c_l0, c_ma_l0, new_lam_l0 = constraint(l0, SELECTION_RATE, lam_l0, c_prev)
    # The reference shares self.c_mas across constraints, so the lasso moving
    # average is seeded with the L0 moving average (reproduced here).
    c_lasso, c_ma_lasso, new_lam_lasso = constraint(
        lasso, TRANSITION_RATE, lam_lasso, c_ma_l0)

    loss = GAMMA * c_l0 + (1.0 - GAMMA) * c_lasso
    new_lambdas = {"L0": new_lam_l0, "lasso": new_lam_lasso}
    new_c_mas = (c_ma_l0, c_ma_lasso)
    return loss, new_lambdas, new_c_mas


def _reference(log_p0, token_mask):
    """Pure-JAX replica of the PyTorch forward (for verification)."""
    pdf0 = jnp.exp(log_p0)
    mask_sum = token_mask.sum(axis=1)
    l0 = jnp.mean(((1.0 - pdf0) * token_mask).sum(axis=1) / mask_sum)
    p0, p1 = pdf0[:, :-1], pdf0[:, 1:]
    lasso_t = (p0 * (1.0 - p1) + (1.0 - p0) * p1) * token_mask[:, :-1]
    lasso = jnp.mean(lasso_t.sum(axis=1) / mask_sum)

    def constraint(value, target, lam, c_ma_prev):
        ct_hat = jnp.abs(value - target)
        ct_ma = LAGRANGE_ALPHA * c_ma_prev + (1.0 - LAGRANGE_ALPHA) * ct_hat
        new_lambda = jnp.clip(lam * jnp.exp(LAGRANGE_LR * ct_ma),
                              LAMBDA_MIN, LAMBDA_MAX)
        return new_lambda * ct_ma, ct_ma

    c_l0, c_ma_l0 = constraint(l0, SELECTION_RATE, LAMBDA_INIT, C_MA_INIT)
    c_lasso, _ = constraint(lasso, TRANSITION_RATE, LAMBDA_INIT, c_ma_l0)
    return GAMMA * c_l0 + (1.0 - GAMMA) * c_lasso


if __name__ == "__main__":
    # Small but lane/sublane-friendly shapes; B deliberately NOT a multiple of
    # the batch tile so the uneven-last-tile path is exercised (grid = 2).
    B, T = 12, 128
    key = jax.random.PRNGKey(0)
    # P(z_t == 0) in (0, 1), then logs -> the z_dist.log_prob(0.) values.
    p0 = jax.random.uniform(key, (B, T), minval=0.05, maxval=0.95,
                            dtype=jnp.float32)
    log_p0 = jnp.log(p0)
    lengths = jnp.array([T, T, 96, 80, T, 64, 120, T, 40, T, 100, 72],
                        dtype=jnp.int32)
    token_mask = (jnp.arange(T)[None, :] < lengths[:, None]).astype(jnp.float32)

    ref = _reference(log_p0, token_mask)

    # 1) General path: arbitrary 0/1 mask streamed from HBM.
    loss_mask, _, _ = controlled_sparsity_loss(log_p0, token_mask)
    jax.block_until_ready(loss_mask)
    assert jnp.allclose(loss_mask, ref, rtol=1e-5, atol=1e-6), (loss_mask, ref)

    # 2) Fast path: prefix mask described by per-row lengths (no mask stream).
    loss_len, _, _ = controlled_sparsity_loss(log_p0, lengths=lengths)
    jax.block_until_ready(loss_len)
    assert jnp.allclose(loss_len, ref, rtol=1e-5, atol=1e-6), (loss_len, ref)

    print("KERNEL_OK")
</pallas_src>

<mosaic_0001>
module attributes {stable_mosaic.version = 11 : i64} {
  func.func @_rows_from_mask_kernel(%arg0: i32, %arg1: memref<8x128xf32, #tpu.memory_space<vmem>>, %arg2: memref<8x128xbf16, #tpu.memory_space<vmem>>, %arg3: memref<8x1xf32, #tpu.memory_space<vmem>>, %arg4: memref<8x1xf32, #tpu.memory_space<vmem>>) attributes {dimension_semantics = [#tpu.dimension_semantics<parallel>], iteration_bounds = array<i64: 2>, scalar_prefetch = 0 : i64, scratch_operands = 0 : i64, tpu.core_type = #tpu.core_type<tc>, window_params = [{transform_indices = @transform_0, window_bounds = array<i64: 8, 128>}, {transform_indices = @transform_1, window_bounds = array<i64: 8, 128>}, {transform_indices = @transform_2, window_bounds = array<i64: 8, 1>}, {transform_indices = @transform_3, window_bounds = array<i64: 8, 1>}]} {
    %c0 = arith.constant 0 : index
    %c0_0 = arith.constant 0 : index
    %0 = vector.load %arg1[%c0, %c0_0] : memref<8x128xf32, #tpu.memory_space<vmem>>, vector<8x128xf32>
    %1 = math.exp %0 : vector<8x128xf32>
    %c0_1 = arith.constant 0 : index
    %c0_2 = arith.constant 0 : index
    %2 = vector.load %arg2[%c0_1, %c0_2] : memref<8x128xbf16, #tpu.memory_space<vmem>>, vector<8x128xbf16>
    %3 = arith.extf %2 : vector<8x128xbf16> to vector<8x128xf32>
    %cst = arith.constant dense<0.000000e+00> : vector<8xf32>
    %4 = vector.multi_reduction <add>, %3, %cst [1] : vector<8x128xf32> to vector<8xf32>
    %5 = vector.shape_cast %4 : vector<8xf32> to vector<8x1xf32>
    %cst_3 = arith.constant 1.000000e+00 : f32
    %6 = vector.broadcast %cst_3 : f32 to vector<8x1xf32>
    %7 = arith.divf %6, %5 : vector<8x1xf32>
    %8 = arith.mulf %1, %3 : vector<8x128xf32>
    %cst_4 = arith.constant dense<0.000000e+00> : vector<8xf32>
    %9 = vector.multi_reduction <add>, %8, %cst_4 [1] : vector<8x128xf32> to vector<8xf32>
    %10 = vector.shape_cast %9 : vector<8xf32> to vector<8x1xf32>
    %11 = arith.mulf %10, %7 : vector<8x1xf32>
    %cst_5 = arith.constant 1.000000e+00 : f32
    %12 = vector.broadcast %cst_5 : f32 to vector<8x1xf32>
    %13 = arith.subf %12, %11 : vector<8x1xf32>
    %c127_i32 = arith.constant 127 : i32
    %14 = tpu.dynamic_rotate %1 by %c127_i32 dim 1 : vector<8x128xf32>, i32 -> vector<8x128xf32>
    %15 = arith.addf %1, %14 : vector<8x128xf32>
    %16 = arith.mulf %1, %14 : vector<8x128xf32>
    %cst_6 = arith.constant 2.000000e+00 : f32
    %17 = vector.broadcast %cst_6 : f32 to vector<8x128xf32>
    %18 = arith.mulf %17, %16 : vector<8x128xf32>
    %19 = arith.subf %15, %18 : vector<8x128xf32>
    %20 = arith.mulf %19, %3 : vector<8x128xf32>
    %cst_7 = arith.constant dense<0.000000e+00> : vector<8xf32>
    %21 = vector.multi_reduction <add>, %20, %cst_7 [1] : vector<8x128xf32> to vector<8xf32>
    %22 = vector.shape_cast %21 : vector<8xf32> to vector<8x1xf32>
    %23 = vector.extract_strided_slice %1 {offsets = [0, 127], sizes = [8, 1], strides = [1, 1]} : vector<8x128xf32> to vector<8x1xf32>
    %24 = vector.extract_strided_slice %1 {offsets = [0, 0], sizes = [8, 1], strides = [1, 1]} : vector<8x128xf32> to vector<8x1xf32>
    %25 = vector.extract_strided_slice %3 {offsets = [0, 127], sizes = [8, 1], strides = [1, 1]} : vector<8x128xf32> to vector<8x1xf32>
    %26 = arith.addf %23, %24 : vector<8x1xf32>
    %27 = arith.mulf %23, %24 : vector<8x1xf32>
    %cst_8 = arith.constant 2.000000e+00 : f32
    %28 = vector.broadcast %cst_8 : f32 to vector<8x1xf32>
    %29 = arith.mulf %28, %27 : vector<8x1xf32>
    %30 = arith.subf %26, %29 : vector<8x1xf32>
    %31 = arith.mulf %30, %25 : vector<8x1xf32>
    %32 = arith.subf %22, %31 : vector<8x1xf32>
    %33 = arith.mulf %32, %7 : vector<8x1xf32>
    %c0_9 = arith.constant 0 : index
    %c0_10 = arith.constant 0 : index
    %34 = vector.load %arg3[%c0_9, %c0_10] : memref<8x1xf32, #tpu.memory_space<vmem>>, vector<8x1xf32>
    tpu.vector_store %arg3[%c0_9, %c0_10], %13 {strides = array<i32>} : memref<8x1xf32, #tpu.memory_space<vmem>>, vector<8x1xf32>,
    %c0_11 = arith.constant 0 : index
    %c0_12 = arith.constant 0 : index
    %35 = vector.load %arg4[%c0_11, %c0_12] : memref<8x1xf32, #tpu.memory_space<vmem>>, vector<8x1xf32>
    tpu.vector_store %arg4[%c0_11, %c0_12], %33 {strides = array<i32>} : memref<8x1xf32, #tpu.memory_space<vmem>>, vector<8x1xf32>,
    return
  }
  func.func @transform_0(%arg0: i32) -> (i32, i32) {
    %c0_i32 = arith.constant 0 : i32
    %c0_i32_0 = arith.constant 0 : i32
    return %arg0, %c0_i32 : i32, i32
  }
  func.func @transform_1(%arg0: i32) -> (i32, i32) {
    %c0_i32 = arith.constant 0 : i32
    %c0_i32_0 = arith.constant 0 : i32
    return %arg0, %c0_i32 : i32, i32
  }
  func.func @transform_2(%arg0: i32) -> (i32, i32) {
    %c0_i32 = arith.constant 0 : i32
    %c0_i32_0 = arith.constant 0 : i32
    return %arg0, %c0_i32 : i32, i32
  }
  func.func @transform_3(%arg0: i32) -> (i32, i32) {
    %c0_i32 = arith.constant 0 : i32
    %c0_i32_0 = arith.constant 0 : i32
    return %arg0, %c0_i32 : i32, i32
  }
}

</mosaic_0001>

<llo_original>
// kernel: tpu_custom_call.1
$region0: #{tpu_custom_call.1}
  #allocation0 [shape = 'u32[]', space=smem, size = 0x4, offset = 0x4, fixed_abs, tag = 'smem constant byte address 0x4 - core index']
  #allocation1 [shape = 'u32[72,128]{1,0:T(1,128)}', space=vmem, size = 0x9000, scoped, tag = 'internal scratch']
  %s0 = inlined_call_operand.hbm [shape: f32[12,128], index: 0, kind: input, shape index: {}]
  %s1 = inlined_call_operand.hbm [shape: bf16[12,128], index: 1, kind: input, shape index: {}]
  %s2 = inlined_call_operand.vmem [shape: f32[12,1], index: 2, kind: output, shape index: {0}]
  %s3 = inlined_call_operand.vmem [shape: f32[12,1], index: 3, kind: output, shape index: {1}]
  %4 = xla_tuple %s2, %s3
  %s5 = sld [smem:[#allocation0]]
  $region57: #{tpu_custom_call.1} parent=0
    _
  %s7 = ssub.s32 1, %s5
  %s8 = scalar_select 0, %s7, %s5
  $region1: #{tpu_custom_call.1} parent=0
    #allocation2 [shape = 'u8[8192]{0}', space=vmem, size = 0x2000, scoped, tag = 'input window, operand 0']
    #allocation3 [shape = 's32[2]{0}', space=sflag, size = 0x8, scoped, tag = 'scoped memory for tpu_custom_call.1']
    #allocation4 [shape = 'u8[4096]{0}', space=vmem, size = 0x1000, scoped, tag = 'input window, operand 1']
    #allocation5 [shape = 's32[2]{0}', space=sflag, size = 0x8, scoped, tag = 'scoped memory for tpu_custom_call.1']
    %9 = vsyncpa [#allocation3], 0
    %s10 = scalar_lea.sflag [#allocation3], 1
    %11 = vsyncpa %s10, 0
    %12 = vsyncpa [#allocation5], 0
    %s13 = scalar_lea.sflag [#allocation5], 1
    %14 = vsyncpa %s13, 0
    loop: start=0, step=1, limit=4
    $region2: #{tpu_custom_call.1} parent=1 // loop_pre_header
      _
    $region3: #{tpu_custom_call.1} parent=1 // loop_header
      %s16 = sphi 0, %s20
      %p17 = scmp.ge.s32.totalorder %s16, 4
      %s26 = sphi 0, %s28
      %s29 = sphi 0, %s26
      %s30 = sphi 0, %s29
      %s46 = sphi 0, %s30
      %s52 = sphi 0, %s54
      %s55 = sphi 0, %s52
      %s56 = sphi 0, %s55
      %s72 = sphi 0, %s56
      %s78 = sphi 0, %s80
      %s81 = sphi 0, %s78
      %s82 = sphi 0, %s81
      %s98 = sphi 0, %s82
      %s104 = sphi 0, %s106
      %s107 = sphi 0, %s104
      %s108 = sphi 0, %s107
      %s124 = sphi 0, %s108
    $region4: #{tpu_custom_call.1} parent=1 // loop_header_branch
      %19 = sbr.rel (%p17) target = $region8
    $region5: #{tpu_custom_call.1} parent=1 // loop_body
      %s21 = ssub.s32 %s16, 1
      %s22 = ssub.s32 %s16, 2
      %s23 = sadd.s32 %s16, 1
      %s24 = ssub.s32 %s16, %s23
      %p25 = scmp.eq.s32.totalorder %s24, 0
      %s27 = sadd.s32 %s26, 1
      %s28 = scalar_select %p25, %s26, %s27
      %p31 = pneg %p25
      %p32 = scmp.eq.s32.totalorder %s16, 1
      %p33 = por %p31, %p32
      %p34 = scmp.ne.s32.totalorder %s26, %s29
      %p35 = scmp.eq.s32.totalorder %s16, 0
      %p36 = por %p34, %p35
      %p37 = scmp.ne.s32.totalorder %s26, %s29
      %p38 = scmp.eq.s32.totalorder %s21, 1
      %p39 = por %p37, %p38
      %p40 = scmp.ne.s32.totalorder %s29, %s30
      %p41 = scmp.eq.s32.totalorder %s21, 0
      %p42 = por %p40, %p41
      %p43 = scmp.ne.s32.totalorder %s29, %s30
      %p44 = scmp.eq.s32.totalorder %s22, 1
      %p45 = por %p43, %p44
      %p47 = scmp.ne.s32.totalorder %s30, %s46
      %p48 = scmp.eq.s32.totalorder %s22, 0
      %p49 = por %p47, %p48
      %s50 = ssub.s32 %s16, %s23
      %p51 = scmp.eq.s32.totalorder %s50, 0
      %s53 = sadd.s32 %s52, 1
      %s54 = scalar_select %p51, %s52, %s53
      %p57 = pneg %p51
      %p58 = scmp.eq.s32.totalorder %s16, 1
      %p59 = por %p57, %p58
      %p60 = scmp.ne.s32.totalorder %s52, %s55
      %p61 = scmp.eq.s32.totalorder %s16, 0
      %p62 = por %p60, %p61
      %p63 = scmp.ne.s32.totalorder %s52, %s55
      %p64 = scmp.eq.s32.totalorder %s21, 1
      %p65 = por %p63, %p64
      %p66 = scmp.ne.s32.totalorder %s55, %s56
      %p67 = scmp.eq.s32.totalorder %s21, 0
      %p68 = por %p66, %p67
      %p69 = scmp.ne.s32.totalorder %s55, %s56
      %p70 = scmp.eq.s32.totalorder %s22, 1
      %p71 = por %p69, %p70
      %p73 = scmp.ne.s32.totalorder %s56, %s72
      %p74 = scmp.eq.s32.totalorder %s22, 0
      %p75 = por %p73, %p74
      %s76 = ssub.s32 %s16, %s23
      %p77 = scmp.eq.s32.totalorder %s76, 0
      %s79 = sadd.s32 %s78, 1
      %s80 = scalar_select %p77, %s78, %s79
      %p83 = pneg %p77
      %p84 = scmp.eq.s32.totalorder %s16, 1
      %p85 = por %p83, %p84
      %p86 = scmp.ne.s32.totalorder %s78, %s81
      %p87 = scmp.eq.s32.totalorder %s16, 0
      %p88 = por %p86, %p87
      %p89 = scmp.ne.s32.totalorder %s78, %s81
      %p90 = scmp.eq.s32.totalorder %s21, 1
      %p91 = por %p89, %p90
      %p92 = scmp.ne.s32.totalorder %s81, %s82
      %p93 = scmp.eq.s32.totalorder %s21, 0
      %p94 = por %p92, %p93
      %p95 = scmp.ne.s32.totalorder %s81, %s82
      %p96 = scmp.eq.s32.totalorder %s22, 1
      %p97 = por %p95, %p96
      %p99 = scmp.ne.s32.totalorder %s82, %s98
      %p100 = scmp.eq.s32.totalorder %s22, 0
      %p101 = por %p99, %p100
      %s102 = ssub.s32 %s16, %s23
      %p103 = scmp.eq.s32.totalorder %s102, 0
      %s105 = sadd.s32 %s104, 1
      %s106 = scalar_select %p103, %s104, %s105
      %p109 = pneg %p103
      %p110 = scmp.eq.s32.totalorder %s16, 1
      %p111 = por %p109, %p110
      %p112 = scmp.ne.s32.totalorder %s104, %s107
      %p113 = scmp.eq.s32.totalorder %s16, 0
      %p114 = por %p112, %p113
      %p115 = scmp.ne.s32.totalorder %s104, %s107
      %p116 = scmp.eq.s32.totalorder %s21, 1
      %p117 = por %p115, %p116
      %p118 = scmp.ne.s32.totalorder %s107, %s108
      %p119 = scmp.eq.s32.totalorder %s21, 0
      %p120 = por %p118, %p119
      %p121 = scmp.ne.s32.totalorder %s107, %s108
      %p122 = scmp.eq.s32.totalorder %s22, 1
      %p123 = por %p121, %p122
      %p125 = scmp.ne.s32.totalorder %s108, %s124
      %p126 = scmp.eq.s32.totalorder %s22, 0
      %p127 = por %p125, %p126
      %p128 = scmp.le.s32.totalorder 1, %s16
      %p129 = scmp.lt.s32.totalorder %s16, 3
      %p130 = pnand %p128, %p129
      %p131 = pneg %p130
      // Predicated region
      $region9: #{tpu_custom_call.1} parent=5 // pred_check
        _
      $region10: #{tpu_custom_call.1} parent=5 // pred_check_branch
        %133 = sbr.rel (%p130) target = $region12
      $region11: #{tpu_custom_call.1} parent=5 // pred_region
        %s134 = ssub.s32 %s16, 1
      $region12: #{tpu_custom_call.1} parent=5 // pred_fallthru
        _
      %p135 = scmp.lt.s32.totalorder %s16, 2
      // Predicated region
      $region13: #{tpu_custom_call.1} parent=5 // pred_check
        %p136 = pneg %p135
      $region14: #{tpu_custom_call.1} parent=5 // pred_check_branch
        %138 = sbr.rel (%p136) target = $region16
      $region15: #{tpu_custom_call.1} parent=5 // pred_region
        // Predicated region
        $region17: #{tpu_custom_call.1} parent=15 // pred_check
          %p139 = pneg %p36
        $region18: #{tpu_custom_call.1} parent=15 // pred_check_branch
          %141 = sbr.rel (%p139) target = $region20
        $region19: #{tpu_custom_call.1} parent=15 // pred_region
          %s142 = sand.u32 %s26, 1
          %s143 = scalar_lea.sflag [#allocation3], %s142
          %s144 = sand.u32 %s26, 1
          %s145 = smul.addr %s144, 8
          %s146 = scalar_lea.vmem [#allocation2], %s145
          %148 = vsyncadd %s143, 0
          %s149 = smul.addr %s16, 8
          %s150 = scalar_lea.hbm %s0, %s149
          %s152 = sshll.u32 %s150, 4
          %s153 = int_to_ptr.hbm [resolvable:$true] %s152
          %s154 = sshll.u32 %s146, 4
          %s155 = int_to_ptr.vmem [resolvable:$true] %s154
          %157 = dma.hbm_to_vmem [thread:$0]  %s153, 128, %s155, %s143
        $region20: #{tpu_custom_call.1} parent=15 // pred_fallthru
          _
        // Predicated region
        $region21: #{tpu_custom_call.1} parent=15 // pred_check
          %p158 = pneg %p62
        $region22: #{tpu_custom_call.1} parent=15 // pred_check_branch
          %160 = sbr.rel (%p158) target = $region24
        $region23: #{tpu_custom_call.1} parent=15 // pred_region
          %s161 = sand.u32 %s52, 1
          %s162 = scalar_lea.sflag [#allocation5], %s161
          %s163 = sand.u32 %s52, 1
          %s164 = smul.addr %s163, 4
          %s165 = scalar_lea.vmem [#allocation4], %s164
          %167 = vsyncadd %s162, 0
          %s168 = smul.addr %s16, 4
          %s169 = scalar_lea.hbm %s1, %s168
          %s171 = sshll.u32 %s169, 4
          %s172 = int_to_ptr.hbm [resolvable:$true] %s171
          %s173 = sshll.u32 %s165, 4
          %s174 = int_to_ptr.vmem [resolvable:$true] %s173
          %176 = dma.hbm_to_vmem [thread:$0]  %s172, 64, %s174, %s162
        $region24: #{tpu_custom_call.1} parent=15 // pred_fallthru
          _
      $region16: #{tpu_custom_call.1} parent=5 // pred_fallthru
        _
      %p177 = scmp.le.s32.totalorder 1, %s16
      %p178 = scmp.lt.s32.totalorder %s16, 3
      %p179 = pnand %p177, %p178
      %p180 = pneg %p179
      // Predicated region
      $region25: #{tpu_custom_call.1} parent=5 // pred_check
        _
      $region26: #{tpu_custom_call.1} parent=5 // pred_check_branch
        %182 = sbr.rel (%p179) target = $region28
      $region27: #{tpu_custom_call.1} parent=5 // pred_region
        %s183 = ssub.s32 %s16, 1
        %s184 = sand.u32 %s29, 1
        %s185 = scalar_lea.sflag [#allocation3], %s184
        %s186 = sand.u32 %s29, 1
        %s187 = smul.addr %s186, 8
        %s188 = scalar_lea.vmem [#allocation2], %s187
        // Predicated region
        $region29: #{tpu_custom_call.1} parent=27 // pred_check
          %p189 = pneg %p42
        $region30: #{tpu_custom_call.1} parent=27 // pred_check_branch
          %191 = sbr.rel (%p189) target = $region32
        $region31: #{tpu_custom_call.1} parent=27 // pred_region
          %193 = dma.done %s185, 128
        $region32: #{tpu_custom_call.1} parent=27 // pred_fallthru
          _
        %s194 = sand.u32 %s55, 1
        %s195 = scalar_lea.sflag [#allocation5], %s194
        %s196 = sand.u32 %s55, 1
        %s197 = smul.addr %s196, 4
        %s198 = scalar_lea.vmem [#allocation4], %s197
        // Predicated region
        $region33: #{tpu_custom_call.1} parent=27 // pred_check
          %p199 = pneg %p68
        $region34: #{tpu_custom_call.1} parent=27 // pred_check_branch
          %201 = sbr.rel (%p199) target = $region36
        $region35: #{tpu_custom_call.1} parent=27 // pred_region
          %203 = dma.done %s195, 64
        $region36: #{tpu_custom_call.1} parent=27 // pred_fallthru
          _
        %s204 = sand.u32 %s29, 1
        %s205 = scalar_lea.sflag [#allocation3], %s204
        %s206 = sand.u32 %s29, 1
        %s207 = smul.addr %s206, 8
        %s208 = scalar_lea.vmem [#allocation2], %s207
        %p209 = pneg %p42
        %p210 = pneg %p39
        %s211 = sand.u32 %s55, 1
        %s212 = scalar_lea.sflag [#allocation5], %s211
        %s213 = sand.u32 %s55, 1
        %s214 = smul.addr %s213, 4
        %s215 = scalar_lea.vmem [#allocation4], %s214
        %p216 = pneg %p68
        %p217 = pneg %p65
        %p218 = pneg %p94
        %p219 = pneg %p91
        %p220 = scmp.lt.s32.totalorder %s21, 1
        %s221 = scalar_select %p220, %s21, 1
        %s222 = smul.addr %s221, 8
        %s223 = scalar_lea.vmem %s2, %s222
        %p224 = pneg %p120
        %p225 = pneg %p117
        %p226 = scmp.lt.s32.totalorder %s21, 1
        %s227 = scalar_select %p226, %s21, 1
        %s228 = smul.addr %s227, 8
        %s229 = scalar_lea.vmem %s3, %s228
        %p230 = scmp.lt.s32.totalorder %s21, 1
        %s231 = scalar_select %p230, %s21, 1
        %s232 = smul.addr %s231, 8
        %s233 = scalar_lea.vmem %s2, %s232
        %p234 = scmp.lt.s32.totalorder %s21, 1
        %s235 = scalar_select %p234, %s21, 1
        %s236 = smul.addr %s235, 8
        %s237 = scalar_lea.vmem %s3, %s236
        %v238 = vld [vmem:[%s188] sm:$0xff]
        %v239 = vmul.f32 %v238, 1.442695
        %v240 = vpow.pop %v239
        %v241 = vld [vmem:[%s198] sm:$0xf]
        %v242 = vunpack.c.l.bf16 %v241
        %243 = vadd.xlane.f32.xlu0 %v242
        %v244 = vpop.xlane.xlu0 %243
        %v245 = vrcp.pop %v244
        %v246 = vmul.f32 %v244, %v245
        %v247 = vsub.f32 1.0, %v246
        %v248 = vmul.f32 %v245, %v247
        %v249 = vadd.f32 %v245, %v248
        %vm250 = vweird.f32 %v244
        %vm251 = vweird.f32 %v245
        %vm252 = vmor %vm250, %vm251
        %v253 = vsel %vm252, %v245, %v249
        %v254 = vand.u32 2147483647, %v244
        %vm255 = vcmp.eq.f32.partialorder %v254, 8.507059e+37
        %v256 = vand.u32 %v244, 2147483648
        %v257 = vor.u32 1.1754944e-38, %v256
        %v258 = vsel %vm255, %v257, %v253
        %v259 = vmul.f32 1.0, %v258
        %v260 = vmul.f32 %v240, %v242
        %261 = vadd.xlane.f32.xlu0 %v260
        %v262 = vpop.xlane.xlu0 %261
        %v263 = vmul.f32 %v262, %v259
        %v264 = vsub.f32 1.0, %v263
        %265 = vrot.lane.b32.xlu0 %v240, 127
        %v266 = vpop.permute.xlu0 %265
        %v267 = vadd.f32 %v240, %v266
        %v268 = vmul.f32 %v240, %v266
        %v269 = vmul.f32 %v268, 2.0
        %v270 = vsub.f32 %v267, %v269
        %v271 = vmul.f32 %v270, %v242
        %272 = vadd.xlane.f32.xlu0 %v271
        %v273 = vpop.xlane.xlu0 %272
        %275 = vrot.lane.b32.xlu0 %v240, 127
        %v276 = vpop.permute.xlu0 %275
        %v278 = vadd.f32 %v240, %v276
        %v279 = vmul.f32 %v240, %v276
        %v280 = vmul.f32 %v279, 2.0
        %v281 = vsub.f32 %v278, %v280
        %v282 = vmul.f32 %v281, %v242
        %v283 = vsub.f32 %v273, %v282
        %v284 = vmul.f32 %v283, %v259
        %vm285 = vcmask 7168
        %286 = vst.msk [vmem:[%s233] sm:$0xff] %vm285, %v264
        %288 = vrot.lane.b32.xlu0 %v284, 1
        %v289 = vpop.permute.xlu0 %288
        %291 = vst.msk [vmem:[%s237] sm:$0xff] %vm285, %v289
        %p292 = scmp.lt.s32.totalorder %s21, 1
        %s293 = scalar_select %p292, %s21, 1
        %s294 = smul.addr %s293, 8
        %s295 = scalar_lea.vmem %s2, %s294
        %p296 = scmp.lt.s32.totalorder %s21, 1
        %s297 = scalar_select %p296, %s21, 1
        %s298 = smul.addr %s297, 8
        %s299 = scalar_lea.vmem %s3, %s298
        // Predicated region
        $region37: #{tpu_custom_call.1} parent=27 // pred_check
          %p300 = pneg %p91
        $region38: #{tpu_custom_call.1} parent=27 // pred_check_branch
          %302 = sbr.rel (%p300) target = $region40
        $region39: #{tpu_custom_call.1} parent=27 // pred_region
          _
        $region40: #{tpu_custom_call.1} parent=27 // pred_fallthru
          _
        // Predicated region
        $region41: #{tpu_custom_call.1} parent=27 // pred_check
          %p303 = pneg %p117
        $region42: #{tpu_custom_call.1} parent=27 // pred_check_branch
          %305 = sbr.rel (%p303) target = $region44
        $region43: #{tpu_custom_call.1} parent=27 // pred_region
          _
        $region44: #{tpu_custom_call.1} parent=27 // pred_fallthru
          _
      $region28: #{tpu_custom_call.1} parent=5 // pred_fallthru
        _
      %p306 = scmp.le.s32.totalorder 2, %s16
      // Predicated region
      $region45: #{tpu_custom_call.1} parent=5 // pred_check
        %p307 = pneg %p306
      $region46: #{tpu_custom_call.1} parent=5 // pred_check_branch
        %309 = sbr.rel (%p307) target = $region48
      $region47: #{tpu_custom_call.1} parent=5 // pred_region
        %s310 = ssub.s32 %s16, 2
        // Predicated region
        $region49: #{tpu_custom_call.1} parent=47 // pred_check
          %p311 = pneg %p97
        $region50: #{tpu_custom_call.1} parent=47 // pred_check_branch
          %313 = sbr.rel (%p311) target = $region52
        $region51: #{tpu_custom_call.1} parent=47 // pred_region
          %p314 = scmp.lt.s32.totalorder %s22, 1
          %s315 = scalar_select %p314, %s22, 1
          %s316 = smul.addr %s315, 8
          %s317 = scalar_lea.vmem %s2, %s316
        $region52: #{tpu_custom_call.1} parent=47 // pred_fallthru
          _
        // Predicated region
        $region53: #{tpu_custom_call.1} parent=47 // pred_check
          %p318 = pneg %p123
        $region54: #{tpu_custom_call.1} parent=47 // pred_check_branch
          %320 = sbr.rel (%p318) target = $region56
        $region55: #{tpu_custom_call.1} parent=47 // pred_region
          %p321 = scmp.lt.s32.totalorder %s22, 1
          %s322 = scalar_select %p321, %s22, 1
          %s323 = smul.addr %s322, 8
          %s324 = scalar_lea.vmem %s3, %s323
        $region56: #{tpu_custom_call.1} parent=47 // pred_fallthru
          _
      $region48: #{tpu_custom_call.1} parent=5 // pred_fallthru
        _
    $region6: #{tpu_custom_call.1} parent=1 // loop_footer
      %s20 = sadd.s32 1, %s16
    $region7: #{tpu_custom_call.1} parent=1 // loop_footer_branch
      %15 = sbr.rel target = $region3
    $region8: #{tpu_custom_call.1} parent=1 // loop_exit
      _
    %325 = vsyncpa [#allocation3], 1
    %s326 = scalar_lea.sflag [#allocation3], 1
    %327 = vsyncpa %s326, 1
    %328 = vsyncpa [#allocation5], 1
    %s329 = scalar_lea.sflag [#allocation5], 1
    %330 = vsyncpa %s329, 1

</llo_original>
